<compile_context>
chip_gen: v7x
topology: tpu7x:2x2x1
jax: 0.10.0
libtpu: 0.0.40
codegen_flags: <defaults>
</compile_context>

<pallas_src>
import functools

import jax
import jax.numpy as jnp
from jax import lax
from jax.experimental import pallas as pl
from jax.experimental.pallas import tpu as pltpu


def _bottleneck_kernel(x_ref, w1_ref, w2_ref, w3_ref,
                       b1_ref, b2_ref, b3_ref, col_ref, row_ref,
                       o_ref, *, H, W):
    HW = H * W

    x = x_ref[0]                       # (Cin, HW), f32, residual kept as-is
    col = col_ref[...]                 # (1, HW) int32: x-coordinate per pixel
    row = row_ref[...]                 # (1, HW) int32: y-coordinate per pixel

    # ---- conv1 (1x1, BN1 scale folded into weights) + bias + relu -------
    h = jnp.dot(w1_ref[...], x.astype(jnp.bfloat16),
                preferred_element_type=jnp.float32)            # (Pp, HW)
    h = jnp.maximum(h + b1_ref[...], 0.0)

    # ---- conv2 (3x3, pad=1, stride=1, BN2 scale folded) + bias + relu ----
    # Build the 9 shifted taps with lane rolls + boundary masks, stack them
    # along the contraction dim, and do a single MXU matmul with K = 9*Pp.
    taps = []
    for dy in (-1, 0, 1):
        for dx in (-1, 0, 1):
            off = dy * W + dx
            t = h if off == 0 else pltpu.roll(h, shift=(-off) % HW, axis=1)
            conds = []
            if dx == -1:
                conds.append(col >= 1)
            elif dx == 1:
                conds.append(col <= W - 2)
            if dy == -1:
                conds.append(row >= 1)
            elif dy == 1:
                conds.append(row <= H - 2)
            if conds:
                m = conds[0]
                for c in conds[1:]:
                    m = jnp.logical_and(m, c)
                t = jnp.where(m, t, 0.0)
            taps.append(t)
    hstack = jnp.concatenate(taps, axis=0).astype(jnp.bfloat16)  # (9*Pp, HW)
    h2 = jnp.dot(w2_ref[...], hstack,
                 preferred_element_type=jnp.float32)             # (Pp, HW)
    h2 = jnp.maximum(h2 + b2_ref[...], 0.0)

    # ---- conv3 (1x1, BN3 scale folded) + bias + residual + relu ----------
    h3 = jnp.dot(w3_ref[...], h2.astype(jnp.bfloat16),
                 preferred_element_type=jnp.float32)             # (Cin, HW)
    out = jnp.maximum(h3 + b3_ref[...] + x, 0.0)
    o_ref[0] = out.astype(o_ref.dtype)


def _fold_bn(gamma, beta, mean, var, eps):
    scale = gamma / jnp.sqrt(var + eps)
    bias = beta - mean * scale
    return scale, bias


def _pad_rows(a, rows):
    pad = rows - a.shape[0]
    return a if pad == 0 else jnp.pad(a, ((0, pad), (0, 0)))


def _pad_cols(a, cols):
    pad = cols - a.shape[1]
    return a if pad == 0 else jnp.pad(a, ((0, 0), (0, pad)))


@jax.jit
def bottleneck_pallas(x, conv1_w, conv2_w, conv3_w, bn1, bn2, bn3, eps=1e-5):
    """x: (N, Cin, H, W) NCHW.  conv*_w: PyTorch OIHW weights.
    bnX = (gamma, beta, running_mean, running_var)."""
    N, Cin, H, W = x.shape
    P = conv1_w.shape[0]
    HW = H * W
    Pp = ((P + 7) // 8) * 8            # pad `planes` to a sublane multiple

    s1, b1 = _fold_bn(*bn1, eps)
    s2, b2 = _fold_bn(*bn2, eps)
    s3, b3 = _fold_bn(*bn3, eps)

    # Fold BN scales into the conv weights (per output channel), pad the
    # planes dimension to Pp (zero rows/cols) and cast to bf16 for the MXU.
    w1 = _pad_rows(conv1_w[:, :, 0, 0] * s1[:, None], Pp).astype(jnp.bfloat16)   # (Pp, Cin)
    w2s = conv2_w * s2[:, None, None, None]                                       # (P, P, 3, 3)
    w2 = jnp.concatenate(
        [_pad_cols(_pad_rows(w2s[:, :, ky, kx], Pp), Pp)
         for ky in range(3) for kx in range(3)],
        axis=1).astype(jnp.bfloat16)                                               # (Pp, 9*Pp)
    w3 = _pad_cols(conv3_w[:, :, 0, 0] * s3[:, None], Pp).astype(jnp.bfloat16)    # (Cin, Pp)

    b1 = _pad_rows(b1.reshape(P, 1), Pp).astype(jnp.float32)                       # (Pp, 1)
    b2 = _pad_rows(b2.reshape(P, 1), Pp).astype(jnp.float32)
    b3 = b3.reshape(Cin, 1).astype(jnp.float32)                                    # (Cin, 1)

    # Per-pixel coordinates for the 3x3 boundary masks (computed once, tiny).
    col = (jnp.arange(HW, dtype=jnp.int32) % W).reshape(1, HW)
    row = (jnp.arange(HW, dtype=jnp.int32) // W).reshape(1, HW)

    xr = x.reshape(N, Cin, HW)          # lane-dense spatial axis last

    full = lambda a: pl.BlockSpec(a.shape, lambda n: (0,) * a.ndim)
    kernel = functools.partial(_bottleneck_kernel, H=H, W=W)

    out = pl.pallas_call(
        kernel,
        out_shape=jax.ShapeDtypeStruct((N, Cin, HW), x.dtype),
        grid_spec=pltpu.PrefetchScalarGridSpec(
            num_scalar_prefetch=0,
            grid=(N,),
            in_specs=[
                pl.BlockSpec((1, Cin, HW), lambda n: (n, 0, 0)),   # x
                full(w1), full(w2), full(w3),
                full(b1), full(b2), full(b3),
                full(col), full(row),
            ],
            out_specs=pl.BlockSpec((1, Cin, HW), lambda n: (n, 0, 0)),
        ),
        compiler_params=pltpu.CompilerParams(
            # Batch images are independent -> shard the N axis across both
            # TensorCores on v7x megacore; harmless on v5e/v6e (1 TC).
            dimension_semantics=("parallel",)),
    )(xr, w1, w2, w3, b1, b2, b3, col, row)

    return out.reshape(N, Cin, H, W)


def bottleneck_reference(x, conv1_w, conv2_w, conv3_w, bn1, bn2, bn3, eps=1e-5):
    """Pure-JAX NCHW reference (eval-mode BatchNorm) for validation."""
    def bn(h, params):
        gamma, beta, mean, var = params
        g = gamma / jnp.sqrt(var + eps)
        return h * g[None, :, None, None] + (beta - mean * g)[None, :, None, None]

    dn = ('NCHW', 'OIHW', 'NCHW')
    h = lax.conv_general_dilated(x, conv1_w, (1, 1), 'VALID', dimension_numbers=dn)
    h = jnp.maximum(bn(h, bn1), 0.0)
    h = lax.conv_general_dilated(h, conv2_w, (1, 1), ((1, 1), (1, 1)),
                                 dimension_numbers=dn)
    h = jnp.maximum(bn(h, bn2), 0.0)
    h = lax.conv_general_dilated(h, conv3_w, (1, 1), 'VALID', dimension_numbers=dn)
    h = bn(h, bn3) + x
    return jnp.maximum(h, 0.0)


if __name__ == "__main__":
    key = jax.random.PRNGKey(0)
    N, H, W = 2, 16, 16
    inplanes, planes = 8, 4            # BottleNeck(inplanes=8, planes=4, stride=1)

    ks = jax.random.split(key, 16)
    x = jax.random.normal(ks[0], (N, inplanes, H, W), jnp.float32)

    # PyTorch-layout (OIHW) conv weights, no bias (as in the module).
    conv1_w = 0.2 * jax.random.normal(ks[1], (planes, inplanes, 1, 1), jnp.float32)
    conv2_w = 0.2 * jax.random.normal(ks[2], (planes, planes, 3, 3), jnp.float32)
    conv3_w = 0.2 * jax.random.normal(ks[3], (inplanes, planes, 1, 1), jnp.float32)

    def bn_params(kg, kb, km, kv, c):
        gamma = 1.0 + 0.1 * jax.random.normal(kg, (c,), jnp.float32)
        beta = 0.1 * jax.random.normal(kb, (c,), jnp.float32)
        mean = 0.1 * jax.random.normal(km, (c,), jnp.float32)
        var = jnp.abs(jax.random.normal(kv, (c,), jnp.float32)) + 0.5
        return gamma, beta, mean, var

    bn1 = bn_params(ks[4], ks[5], ks[6], ks[7], planes)
    bn2 = bn_params(ks[8], ks[9], ks[10], ks[11], planes)
    bn3 = bn_params(ks[12], ks[13], ks[14], ks[15], inplanes)

    out = bottleneck_pallas(x, conv1_w, conv2_w, conv3_w, bn1, bn2, bn3)
    out = jax.block_until_ready(out)

    ref = bottleneck_reference(x, conv1_w, conv2_w, conv3_w, bn1, bn2, bn3)
    assert out.shape == (N, inplanes, H, W)
    max_err = float(jnp.max(jnp.abs(out - ref)))
    # bf16 MXU operands vs f32 reference -> loose-but-discriminating tolerance.
    assert jnp.allclose(out, ref, atol=5e-2, rtol=5e-2), f"max abs err {max_err}"

    print("KERNEL_OK")
</pallas_src>

<mosaic_0001>
module attributes {stable_mosaic.version = 11 : i64} {
  func.func @_bottleneck_kernel(%arg0: i32, %arg1: memref<1x8x256xf32, #tpu.memory_space<vmem>>, %arg2: memref<8x8xbf16, #tpu.memory_space<vmem>>, %arg3: memref<8x72xbf16, #tpu.memory_space<vmem>>, %arg4: memref<8x8xbf16, #tpu.memory_space<vmem>>, %arg5: memref<8x1xf32, #tpu.memory_space<vmem>>, %arg6: memref<8x1xf32, #tpu.memory_space<vmem>>, %arg7: memref<8x1xf32, #tpu.memory_space<vmem>>, %arg8: memref<1x256xi32, #tpu.memory_space<vmem>>, %arg9: memref<1x256xi32, #tpu.memory_space<vmem>>, %arg10: memref<1x8x256xf32, #tpu.memory_space<vmem>>) attributes {dimension_semantics = [#tpu.dimension_semantics<parallel>], iteration_bounds = array<i64: 2>, scalar_prefetch = 0 : i64, scratch_operands = 0 : i64, tpu.core_type = #tpu.core_type<tc>, window_params = [{transform_indices = @transform_0, window_bounds = array<i64: 1, 8, 256>}, {pipeline_mode = #tpu.pipeline_mode<synchronous>, transform_indices = @transform_1, window_bounds = array<i64: 8, 8>}, {pipeline_mode = #tpu.pipeline_mode<synchronous>, transform_indices = @transform_2, window_bounds = array<i64: 8, 72>}, {pipeline_mode = #tpu.pipeline_mode<synchronous>, transform_indices = @transform_3, window_bounds = array<i64: 8, 8>}, {pipeline_mode = #tpu.pipeline_mode<synchronous>, transform_indices = @transform_4, window_bounds = array<i64: 8, 1>}, {pipeline_mode = #tpu.pipeline_mode<synchronous>, transform_indices = @transform_5, window_bounds = array<i64: 8, 1>}, {pipeline_mode = #tpu.pipeline_mode<synchronous>, transform_indices = @transform_6, window_bounds = array<i64: 8, 1>}, {pipeline_mode = #tpu.pipeline_mode<synchronous>, transform_indices = @transform_7, window_bounds = array<i64: 1, 256>}, {pipeline_mode = #tpu.pipeline_mode<synchronous>, transform_indices = @transform_8, window_bounds = array<i64: 1, 256>}, {transform_indices = @transform_9, window_bounds = array<i64: 1, 8, 256>}]} {
    %c0 = arith.constant 0 : index
    %c0_0 = arith.constant 0 : index
    %c0_1 = arith.constant 0 : index
    %0 = vector.load %arg1[%c0, %c0_0, %c0_1] : memref<1x8x256xf32, #tpu.memory_space<vmem>>, vector<1x8x256xf32>
    %1 = vector.shape_cast %0 : vector<1x8x256xf32> to vector<8x256xf32>
    %c0_2 = arith.constant 0 : index
    %c0_3 = arith.constant 0 : index
    %2 = vector.load %arg8[%c0_2, %c0_3] : memref<1x256xi32, #tpu.memory_space<vmem>>, vector<1x256xi32>
    %c0_4 = arith.constant 0 : index
    %c0_5 = arith.constant 0 : index
    %3 = vector.load %arg9[%c0_4, %c0_5] : memref<1x256xi32, #tpu.memory_space<vmem>>, vector<1x256xi32>
    %c0_6 = arith.constant 0 : index
    %c0_7 = arith.constant 0 : index
    %4 = vector.load %arg2[%c0_6, %c0_7] : memref<8x8xbf16, #tpu.memory_space<vmem>>, vector<8x8xbf16>
    %5 = arith.truncf %1 : vector<8x256xf32> to vector<8x256xbf16>
    %cst = arith.constant dense<0.000000e+00> : vector<8x256xf32>
    %6 = tpu.matmul %4, %5, %cst {dimension_numbers = #tpu.dot_dimension_numbers<[1], [0], [0], [1], [0, 0, 1, 1], [], []>} : vector<8x8xbf16>, vector<8x256xbf16>, vector<8x256xf32> -> vector<8x256xf32>
    %c0_8 = arith.constant 0 : index
    %c0_9 = arith.constant 0 : index
    %7 = vector.load %arg5[%c0_8, %c0_9] : memref<8x1xf32, #tpu.memory_space<vmem>>, vector<8x1xf32>
    %8 = vector.broadcast %7 : vector<8x1xf32> to vector<8x256xf32>
    %9 = arith.addf %6, %8 : vector<8x256xf32>
    %cst_10 = arith.constant 0.000000e+00 : f32
    %10 = vector.broadcast %cst_10 : f32 to vector<8x256xf32>
    %11 = arith.maximumf %9, %10 : vector<8x256xf32>
    %c17_i32 = arith.constant 17 : i32
    %12 = tpu.dynamic_rotate %11 by %c17_i32 dim 1 : vector<8x256xf32>, i32 -> vector<8x256xf32>
    %c1_i32 = arith.constant 1 : i32
    %13 = vector.broadcast %c1_i32 : i32 to vector<1x256xi32>
    %14 = arith.cmpi sge, %2, %13 : vector<1x256xi32>
    %c1_i32_11 = arith.constant 1 : i32
    %15 = vector.broadcast %c1_i32_11 : i32 to vector<1x256xi32>
    %16 = arith.cmpi sge, %3, %15 : vector<1x256xi32>
    %17 = arith.andi %14, %16 : vector<1x256xi1>
    %cst_12 = arith.constant 0.000000e+00 : f32
    %18 = vector.shape_cast %17 : vector<1x256xi1> to vector<1x256xi1>
    %19 = vector.broadcast %18 : vector<1x256xi1> to vector<8x256xi1>
    %20 = vector.broadcast %cst_12 : f32 to vector<8x256xf32>
    %21 = arith.select %19, %12, %20 : vector<8x256xi1>, vector<8x256xf32>
    %c16_i32 = arith.constant 16 : i32
    %22 = tpu.dynamic_rotate %11 by %c16_i32 dim 1 : vector<8x256xf32>, i32 -> vector<8x256xf32>
    %c1_i32_13 = arith.constant 1 : i32
    %23 = vector.broadcast %c1_i32_13 : i32 to vector<1x256xi32>
    %24 = arith.cmpi sge, %3, %23 : vector<1x256xi32>
    %cst_14 = arith.constant 0.000000e+00 : f32
    %25 = vector.shape_cast %24 : vector<1x256xi1> to vector<1x256xi1>
    %26 = vector.broadcast %25 : vector<1x256xi1> to vector<8x256xi1>
    %27 = vector.broadcast %cst_14 : f32 to vector<8x256xf32>
    %28 = arith.select %26, %22, %27 : vector<8x256xi1>, vector<8x256xf32>
    %c15_i32 = arith.constant 15 : i32
    %29 = tpu.dynamic_rotate %11 by %c15_i32 dim 1 : vector<8x256xf32>, i32 -> vector<8x256xf32>
    %c14_i32 = arith.constant 14 : i32
    %30 = vector.broadcast %c14_i32 : i32 to vector<1x256xi32>
    %31 = arith.cmpi sle, %2, %30 : vector<1x256xi32>
    %c1_i32_15 = arith.constant 1 : i32
    %32 = vector.broadcast %c1_i32_15 : i32 to vector<1x256xi32>
    %33 = arith.cmpi sge, %3, %32 : vector<1x256xi32>
    %34 = arith.andi %31, %33 : vector<1x256xi1>
    %cst_16 = arith.constant 0.000000e+00 : f32
    %35 = vector.shape_cast %34 : vector<1x256xi1> to vector<1x256xi1>
    %36 = vector.broadcast %35 : vector<1x256xi1> to vector<8x256xi1>
    %37 = vector.broadcast %cst_16 : f32 to vector<8x256xf32>
    %38 = arith.select %36, %29, %37 : vector<8x256xi1>, vector<8x256xf32>
    %c1_i32_17 = arith.constant 1 : i32
    %39 = tpu.dynamic_rotate %11 by %c1_i32_17 dim 1 : vector<8x256xf32>, i32 -> vector<8x256xf32>
    %c1_i32_18 = arith.constant 1 : i32
    %40 = vector.broadcast %c1_i32_18 : i32 to vector<1x256xi32>
    %41 = arith.cmpi sge, %2, %40 : vector<1x256xi32>
    %cst_19 = arith.constant 0.000000e+00 : f32
    %42 = vector.shape_cast %41 : vector<1x256xi1> to vector<1x256xi1>
    %43 = vector.broadcast %42 : vector<1x256xi1> to vector<8x256xi1>
    %44 = vector.broadcast %cst_19 : f32 to vector<8x256xf32>
    %45 = arith.select %43, %39, %44 : vector<8x256xi1>, vector<8x256xf32>
    %c255_i32 = arith.constant 255 : i32
    %46 = tpu.dynamic_rotate %11 by %c255_i32 dim 1 : vector<8x256xf32>, i32 -> vector<8x256xf32>
    %c14_i32_20 = arith.constant 14 : i32
    %47 = vector.broadcast %c14_i32_20 : i32 to vector<1x256xi32>
    %48 = arith.cmpi sle, %2, %47 : vector<1x256xi32>
    %cst_21 = arith.constant 0.000000e+00 : f32
    %49 = vector.shape_cast %48 : vector<1x256xi1> to vector<1x256xi1>
    %50 = vector.broadcast %49 : vector<1x256xi1> to vector<8x256xi1>
    %51 = vector.broadcast %cst_21 : f32 to vector<8x256xf32>
    %52 = arith.select %50, %46, %51 : vector<8x256xi1>, vector<8x256xf32>
    %c241_i32 = arith.constant 241 : i32
    %53 = tpu.dynamic_rotate %11 by %c241_i32 dim 1 : vector<8x256xf32>, i32 -> vector<8x256xf32>
    %c1_i32_22 = arith.constant 1 : i32
    %54 = vector.broadcast %c1_i32_22 : i32 to vector<1x256xi32>
    %55 = arith.cmpi sge, %2, %54 : vector<1x256xi32>
    %c14_i32_23 = arith.constant 14 : i32
    %56 = vector.broadcast %c14_i32_23 : i32 to vector<1x256xi32>
    %57 = arith.cmpi sle, %3, %56 : vector<1x256xi32>
    %58 = arith.andi %55, %57 : vector<1x256xi1>
    %cst_24 = arith.constant 0.000000e+00 : f32
    %59 = vector.shape_cast %58 : vector<1x256xi1> to vector<1x256xi1>
    %60 = vector.broadcast %59 : vector<1x256xi1> to vector<8x256xi1>
    %61 = vector.broadcast %cst_24 : f32 to vector<8x256xf32>
    %62 = arith.select %60, %53, %61 : vector<8x256xi1>, vector<8x256xf32>
    %c240_i32 = arith.constant 240 : i32
    %63 = tpu.dynamic_rotate %11 by %c240_i32 dim 1 : vector<8x256xf32>, i32 -> vector<8x256xf32>
    %c14_i32_25 = arith.constant 14 : i32
    %64 = vector.broadcast %c14_i32_25 : i32 to vector<1x256xi32>
    %65 = arith.cmpi sle, %3, %64 : vector<1x256xi32>
    %cst_26 = arith.constant 0.000000e+00 : f32
    %66 = vector.shape_cast %65 : vector<1x256xi1> to vector<1x256xi1>
    %67 = vector.broadcast %66 : vector<1x256xi1> to vector<8x256xi1>
    %68 = vector.broadcast %cst_26 : f32 to vector<8x256xf32>
    %69 = arith.select %67, %63, %68 : vector<8x256xi1>, vector<8x256xf32>
    %c239_i32 = arith.constant 239 : i32
    %70 = tpu.dynamic_rotate %11 by %c239_i32 dim 1 : vector<8x256xf32>, i32 -> vector<8x256xf32>
    %c14_i32_27 = arith.constant 14 : i32
    %71 = vector.broadcast %c14_i32_27 : i32 to vector<1x256xi32>
    %72 = arith.cmpi sle, %2, %71 : vector<1x256xi32>
    %c14_i32_28 = arith.constant 14 : i32
    %73 = vector.broadcast %c14_i32_28 : i32 to vector<1x256xi32>
    %74 = arith.cmpi sle, %3, %73 : vector<1x256xi32>
    %75 = arith.andi %72, %74 : vector<1x256xi1>
    %cst_29 = arith.constant 0.000000e+00 : f32
    %76 = vector.shape_cast %75 : vector<1x256xi1> to vector<1x256xi1>
    %77 = vector.broadcast %76 : vector<1x256xi1> to vector<8x256xi1>
    %78 = vector.broadcast %cst_29 : f32 to vector<8x256xf32>
    %79 = arith.select %77, %70, %78 : vector<8x256xi1>, vector<8x256xf32>
    %80 = tpu.concatenate %21, %28, %38, %45, %11, %52, %62, %69, %79 in 0 : vector<8x256xf32>, vector<8x256xf32>, vector<8x256xf32>, vector<8x256xf32>, vector<8x256xf32>, vector<8x256xf32>, vector<8x256xf32>, vector<8x256xf32>, vector<8x256xf32> -> vector<72x256xf32>
    %81 = arith.truncf %80 : vector<72x256xf32> to vector<72x256xbf16>
    %c0_30 = arith.constant 0 : index
    %c0_31 = arith.constant 0 : index
    %82 = vector.load %arg3[%c0_30, %c0_31] : memref<8x72xbf16, #tpu.memory_space<vmem>>, vector<8x72xbf16>
    %cst_32 = arith.constant dense<0.000000e+00> : vector<8x256xf32>
    %83 = tpu.matmul %82, %81, %cst_32 {dimension_numbers = #tpu.dot_dimension_numbers<[1], [0], [0], [1], [0, 0, 1, 1], [], []>} : vector<8x72xbf16>, vector<72x256xbf16>, vector<8x256xf32> -> vector<8x256xf32>
    %c0_33 = arith.constant 0 : index
    %c0_34 = arith.constant 0 : index
    %84 = vector.load %arg6[%c0_33, %c0_34] : memref<8x1xf32, #tpu.memory_space<vmem>>, vector<8x1xf32>
    %85 = vector.broadcast %84 : vector<8x1xf32> to vector<8x256xf32>
    %86 = arith.addf %83, %85 : vector<8x256xf32>
    %cst_35 = arith.constant 0.000000e+00 : f32
    %87 = vector.broadcast %cst_35 : f32 to vector<8x256xf32>
    %88 = arith.maximumf %86, %87 : vector<8x256xf32>
    %c0_36 = arith.constant 0 : index
    %c0_37 = arith.constant 0 : index
    %89 = vector.load %arg4[%c0_36, %c0_37] : memref<8x8xbf16, #tpu.memory_space<vmem>>, vector<8x8xbf16>
    %90 = arith.truncf %88 : vector<8x256xf32> to vector<8x256xbf16>
    %cst_38 = arith.constant dense<0.000000e+00> : vector<8x256xf32>
    %91 = tpu.matmul %89, %90, %cst_38 {dimension_numbers = #tpu.dot_dimension_numbers<[1], [0], [0], [1], [0, 0, 1, 1], [], []>} : vector<8x8xbf16>, vector<8x256xbf16>, vector<8x256xf32> -> vector<8x256xf32>
    %c0_39 = arith.constant 0 : index
    %c0_40 = arith.constant 0 : index
    %92 = vector.load %arg7[%c0_39, %c0_40] : memref<8x1xf32, #tpu.memory_space<vmem>>, vector<8x1xf32>
    %93 = vector.broadcast %92 : vector<8x1xf32> to vector<8x256xf32>
    %94 = arith.addf %91, %93 : vector<8x256xf32>
    %95 = arith.addf %94, %1 : vector<8x256xf32>
    %cst_41 = arith.constant 0.000000e+00 : f32
    %96 = vector.broadcast %cst_41 : f32 to vector<8x256xf32>
    %97 = arith.maximumf %95, %96 : vector<8x256xf32>
    %c0_42 = arith.constant 0 : index
    %c0_43 = arith.constant 0 : index
    %c0_44 = arith.constant 0 : index
    %98 = vector.load %arg10[%c0_42, %c0_43, %c0_44] : memref<1x8x256xf32, #tpu.memory_space<vmem>>, vector<1x8x256xf32>
    %99 = vector.shape_cast %98 : vector<1x8x256xf32> to vector<8x256xf32>
    %100 = vector.shape_cast %97 : vector<8x256xf32> to vector<1x8x256xf32>
    tpu.vector_store %arg10[%c0_42, %c0_43, %c0_44], %100 {strides = array<i32>} : memref<1x8x256xf32, #tpu.memory_space<vmem>>, vector<1x8x256xf32>,
    return
  }
  func.func @transform_0(%arg0: i32) -> (i32, i32, i32) {
    %c0_i32 = arith.constant 0 : i32
    %c0_i32_0 = arith.constant 0 : i32
    %c0_i32_1 = arith.constant 0 : i32
    return %arg0, %c0_i32, %c0_i32_0 : i32, i32, i32
  }
  func.func @transform_1(%arg0: i32) -> (i32, i32) {
    %c0_i32 = arith.constant 0 : i32
    %c0_i32_0 = arith.constant 0 : i32
    %c0_i32_1 = arith.constant 0 : i32
    return %c0_i32, %c0_i32_0 : i32, i32
  }
  func.func @transform_2(%arg0: i32) -> (i32, i32) {
    %c0_i32 = arith.constant 0 : i32
    %c0_i32_0 = arith.constant 0 : i32
    %c0_i32_1 = arith.constant 0 : i32
    return %c0_i32, %c0_i32_0 : i32, i32
  }
  func.func @transform_3(%arg0: i32) -> (i32, i32) {
    %c0_i32 = arith.constant 0 : i32
    %c0_i32_0 = arith.constant 0 : i32
    %c0_i32_1 = arith.constant 0 : i32
    return %c0_i32, %c0_i32_0 : i32, i32
  }
  func.func @transform_4(%arg0: i32) -> (i32, i32) {
    %c0_i32 = arith.constant 0 : i32
    %c0_i32_0 = arith.constant 0 : i32
    %c0_i32_1 = arith.constant 0 : i32
    return %c0_i32, %c0_i32_0 : i32, i32
  }
  func.func @transform_5(%arg0: i32) -> (i32, i32) {
    %c0_i32 = arith.constant 0 : i32
    %c0_i32_0 = arith.constant 0 : i32
    %c0_i32_1 = arith.constant 0 : i32
    return %c0_i32, %c0_i32_0 : i32, i32
  }
  func.func @transform_6(%arg0: i32) -> (i32, i32) {
    %c0_i32 = arith.constant 0 : i32
    %c0_i32_0 = arith.constant 0 : i32
    %c0_i32_1 = arith.constant 0 : i32
    return %c0_i32, %c0_i32_0 : i32, i32
  }
  func.func @transform_7(%arg0: i32) -> (i32, i32) {
    %c0_i32 = arith.constant 0 : i32
    %c0_i32_0 = arith.constant 0 : i32
    %c0_i32_1 = arith.constant 0 : i32
    return %c0_i32, %c0_i32_0 : i32, i32
  }
  func.func @transform_8(%arg0: i32) -> (i32, i32) {
    %c0_i32 = arith.constant 0 : i32
    %c0_i32_0 = arith.constant 0 : i32
    %c0_i32_1 = arith.constant 0 : i32
    return %c0_i32, %c0_i32_0 : i32, i32
  }
  func.func @transform_9(%arg0: i32) -> (i32, i32, i32) {
    %c0_i32 = arith.constant 0 : i32
    %c0_i32_0 = arith.constant 0 : i32
    %c0_i32_1 = arith.constant 0 : i32
    return %arg0, %c0_i32, %c0_i32_0 : i32, i32, i32
  }
}

</mosaic_0001>

<llo_original>
// kernel: bottleneck_pallas.1
$region0: #{bottleneck_pallas.1}
  #allocation0 [shape = 'u32[]', space=smem, size = 0x4, offset = 0x4, fixed_abs, tag = 'smem constant byte address 0x4 - core index']
  #allocation1 [shape = 'u32[144,128]{1,0:T(1,128)}', space=vmem, size = 0x12000, scoped, tag = 'internal scratch']
  %s0 = inlined_call_operand.vmem [shape: f32[2,8,256], index: 0, kind: input, shape index: {}]
  %s1 = inlined_call_operand.vmem [shape: bf16[8,8], index: 1, kind: input, shape index: {}]
  %s2 = inlined_call_operand.vmem [shape: bf16[8,72], index: 2, kind: input, shape index: {}]
  %s3 = inlined_call_operand.vmem [shape: bf16[8,8], index: 3, kind: input, shape index: {}]
  %s4 = inlined_call_operand.vmem [shape: f32[8,1], index: 4, kind: input, shape index: {}]
  %s5 = inlined_call_operand.vmem [shape: f32[8,1], index: 5, kind: input, shape index: {}]
  %s6 = inlined_call_operand.vmem [shape: f32[8,1], index: 6, kind: input, shape index: {}]
  %s7 = inlined_call_operand.vmem [shape: s32[1,256], index: 7, kind: input, shape index: {}]
  %s8 = inlined_call_operand.vmem [shape: s32[1,256], index: 8, kind: input, shape index: {}]
  %s9 = inlined_call_operand.vmem [shape: f32[2,8,256], index: 9, kind: output, shape index: {}]
  %s10 = sld [smem:[#allocation0]]
  $region69: #{bottleneck_pallas.1} parent=0
    _
  %s12 = ssub.s32 1, %s10
  %s13 = scalar_select 0, %s12, %s10
  loop: start=0, step=1, limit=4
  $region2: #{bottleneck_pallas.1} parent=0 // loop_pre_header
    _
  $region3: #{bottleneck_pallas.1} parent=0 // loop_header
    %s15 = sphi 0, %s19
    %p16 = scmp.ge.s32.totalorder %s15, 4
    %s25 = sphi 0, %s27
    %s28 = sphi 0, %s25
    %s29 = sphi 0, %s28
    %s45 = sphi 0, %s29
    %s49 = sphi 0, %s49
    %s51 = sphi 0, %s49
    %s52 = sphi 0, %s51
    %s66 = sphi 0, %s52
    %s70 = sphi 0, %s70
    %s72 = sphi 0, %s70
    %s73 = sphi 0, %s72
    %s87 = sphi 0, %s73
    %s91 = sphi 0, %s91
    %s93 = sphi 0, %s91
    %s94 = sphi 0, %s93
    %s108 = sphi 0, %s94
    %s112 = sphi 0, %s112
    %s114 = sphi 0, %s112
    %s115 = sphi 0, %s114
    %s129 = sphi 0, %s115
    %s133 = sphi 0, %s133
    %s135 = sphi 0, %s133
    %s136 = sphi 0, %s135
    %s150 = sphi 0, %s136
    %s154 = sphi 0, %s154
    %s156 = sphi 0, %s154
    %s157 = sphi 0, %s156
    %s171 = sphi 0, %s157
    %s175 = sphi 0, %s175
    %s177 = sphi 0, %s175
    %s178 = sphi 0, %s177
    %s192 = sphi 0, %s178
    %s196 = sphi 0, %s196
    %s198 = sphi 0, %s196
    %s199 = sphi 0, %s198
    %s213 = sphi 0, %s199
    %s219 = sphi 0, %s221
    %s222 = sphi 0, %s219
    %s223 = sphi 0, %s222
    %s239 = sphi 0, %s223
  $region4: #{bottleneck_pallas.1} parent=0 // loop_header_branch
    %18 = sbr.rel (%p16) target = $region8
  $region5: #{bottleneck_pallas.1} parent=0 // loop_body
    %s20 = ssub.s32 %s15, 1
    %s21 = ssub.s32 %s15, 2
    %s22 = sadd.s32 %s15, 1
    %s23 = ssub.s32 %s15, %s22
    %p24 = scmp.eq.s32.totalorder %s23, 0
    %s26 = sadd.s32 %s25, 1
    %s27 = scalar_select %p24, %s25, %s26
    %p30 = pneg %p24
    %p31 = scmp.eq.s32.totalorder %s15, 1
    %p32 = por %p30, %p31
    %p33 = scmp.ne.s32.totalorder %s25, %s28
    %p34 = scmp.eq.s32.totalorder %s15, 0
    %p35 = por %p33, %p34
    %p36 = scmp.ne.s32.totalorder %s25, %s28
    %p37 = scmp.eq.s32.totalorder %s20, 1
    %p38 = por %p36, %p37
    %p39 = scmp.ne.s32.totalorder %s28, %s29
    %p40 = scmp.eq.s32.totalorder %s20, 0
    %p41 = por %p39, %p40
    %p42 = scmp.ne.s32.totalorder %s28, %s29
    %p43 = scmp.eq.s32.totalorder %s21, 1
    %p44 = por %p42, %p43
    %p46 = scmp.ne.s32.totalorder %s29, %s45
    %p47 = scmp.eq.s32.totalorder %s21, 0
    %p48 = por %p46, %p47
    %s50 = sadd.s32 %s49, 1
    %p53 = scmp.eq.s32.totalorder %s15, 1
    %p54 = scmp.ne.s32.totalorder %s49, %s51
    %p55 = scmp.eq.s32.totalorder %s15, 0
    %p56 = por %p54, %p55
    %p57 = scmp.ne.s32.totalorder %s49, %s51
    %p58 = scmp.eq.s32.totalorder %s20, 1
    %p59 = por %p57, %p58
    %p60 = scmp.ne.s32.totalorder %s51, %s52
    %p61 = scmp.eq.s32.totalorder %s20, 0
    %p62 = por %p60, %p61
    %p63 = scmp.ne.s32.totalorder %s51, %s52
    %p64 = scmp.eq.s32.totalorder %s21, 1
    %p65 = por %p63, %p64
    %p67 = scmp.ne.s32.totalorder %s52, %s66
    %p68 = scmp.eq.s32.totalorder %s21, 0
    %p69 = por %p67, %p68
    %s71 = sadd.s32 %s70, 1
    %p74 = scmp.eq.s32.totalorder %s15, 1
    %p75 = scmp.ne.s32.totalorder %s70, %s72
    %p76 = scmp.eq.s32.totalorder %s15, 0
    %p77 = por %p75, %p76
    %p78 = scmp.ne.s32.totalorder %s70, %s72
    %p79 = scmp.eq.s32.totalorder %s20, 1
    %p80 = por %p78, %p79
    %p81 = scmp.ne.s32.totalorder %s72, %s73
    %p82 = scmp.eq.s32.totalorder %s20, 0
    %p83 = por %p81, %p82
    %p84 = scmp.ne.s32.totalorder %s72, %s73
    %p85 = scmp.eq.s32.totalorder %s21, 1
    %p86 = por %p84, %p85
    %p88 = scmp.ne.s32.totalorder %s73, %s87
    %p89 = scmp.eq.s32.totalorder %s21, 0
    %p90 = por %p88, %p89
    %s92 = sadd.s32 %s91, 1
    %p95 = scmp.eq.s32.totalorder %s15, 1
    %p96 = scmp.ne.s32.totalorder %s91, %s93
    %p97 = scmp.eq.s32.totalorder %s15, 0
    %p98 = por %p96, %p97
    %p99 = scmp.ne.s32.totalorder %s91, %s93
    %p100 = scmp.eq.s32.totalorder %s20, 1
    %p101 = por %p99, %p100
    %p102 = scmp.ne.s32.totalorder %s93, %s94
    %p103 = scmp.eq.s32.totalorder %s20, 0
    %p104 = por %p102, %p103
    %p105 = scmp.ne.s32.totalorder %s93, %s94
    %p106 = scmp.eq.s32.totalorder %s21, 1
    %p107 = por %p105, %p106
    %p109 = scmp.ne.s32.totalorder %s94, %s108
    %p110 = scmp.eq.s32.totalorder %s21, 0
    %p111 = por %p109, %p110
    %s113 = sadd.s32 %s112, 1
    %p116 = scmp.eq.s32.totalorder %s15, 1
    %p117 = scmp.ne.s32.totalorder %s112, %s114
    %p118 = scmp.eq.s32.totalorder %s15, 0
    %p119 = por %p117, %p118
    %p120 = scmp.ne.s32.totalorder %s112, %s114
    %p121 = scmp.eq.s32.totalorder %s20, 1
    %p122 = por %p120, %p121
    %p123 = scmp.ne.s32.totalorder %s114, %s115
    %p124 = scmp.eq.s32.totalorder %s20, 0
    %p125 = por %p123, %p124
    %p126 = scmp.ne.s32.totalorder %s114, %s115
    %p127 = scmp.eq.s32.totalorder %s21, 1
    %p128 = por %p126, %p127
    %p130 = scmp.ne.s32.totalorder %s115, %s129
    %p131 = scmp.eq.s32.totalorder %s21, 0
    %p132 = por %p130, %p131
    %s134 = sadd.s32 %s133, 1
    %p137 = scmp.eq.s32.totalorder %s15, 1
    %p138 = scmp.ne.s32.totalorder %s133, %s135
    %p139 = scmp.eq.s32.totalorder %s15, 0
    %p140 = por %p138, %p139
    %p141 = scmp.ne.s32.totalorder %s133, %s135
    %p142 = scmp.eq.s32.totalorder %s20, 1
    %p143 = por %p141, %p142
    %p144 = scmp.ne.s32.totalorder %s135, %s136
    %p145 = scmp.eq.s32.totalorder %s20, 0
    %p146 = por %p144, %p145
    %p147 = scmp.ne.s32.totalorder %s135, %s136
    %p148 = scmp.eq.s32.totalorder %s21, 1
    %p149 = por %p147, %p148
    %p151 = scmp.ne.s32.totalorder %s136, %s150
    %p152 = scmp.eq.s32.totalorder %s21, 0
    %p153 = por %p151, %p152
    %s155 = sadd.s32 %s154, 1
    %p158 = scmp.eq.s32.totalorder %s15, 1
    %p159 = scmp.ne.s32.totalorder %s154, %s156
    %p160 = scmp.eq.s32.totalorder %s15, 0
    %p161 = por %p159, %p160
    %p162 = scmp.ne.s32.totalorder %s154, %s156
    %p163 = scmp.eq.s32.totalorder %s20, 1
    %p164 = por %p162, %p163
    %p165 = scmp.ne.s32.totalorder %s156, %s157
    %p166 = scmp.eq.s32.totalorder %s20, 0
    %p167 = por %p165, %p166
    %p168 = scmp.ne.s32.totalorder %s156, %s157
    %p169 = scmp.eq.s32.totalorder %s21, 1
    %p170 = por %p168, %p169
    %p172 = scmp.ne.s32.totalorder %s157, %s171
    %p173 = scmp.eq.s32.totalorder %s21, 0
    %p174 = por %p172, %p173
    %s176 = sadd.s32 %s175, 1
    %p179 = scmp.eq.s32.totalorder %s15, 1
    %p180 = scmp.ne.s32.totalorder %s175, %s177
    %p181 = scmp.eq.s32.totalorder %s15, 0
    %p182 = por %p180, %p181
    %p183 = scmp.ne.s32.totalorder %s175, %s177
    %p184 = scmp.eq.s32.totalorder %s20, 1
    %p185 = por %p183, %p184
    %p186 = scmp.ne.s32.totalorder %s177, %s178
    %p187 = scmp.eq.s32.totalorder %s20, 0
    %p188 = por %p186, %p187
    %p189 = scmp.ne.s32.totalorder %s177, %s178
    %p190 = scmp.eq.s32.totalorder %s21, 1
    %p191 = por %p189, %p190
    %p193 = scmp.ne.s32.totalorder %s178, %s192
    %p194 = scmp.eq.s32.totalorder %s21, 0
    %p195 = por %p193, %p194
    %s197 = sadd.s32 %s196, 1
    %p200 = scmp.eq.s32.totalorder %s15, 1
    %p201 = scmp.ne.s32.totalorder %s196, %s198
    %p202 = scmp.eq.s32.totalorder %s15, 0
    %p203 = por %p201, %p202
    %p204 = scmp.ne.s32.totalorder %s196, %s198
    %p205 = scmp.eq.s32.totalorder %s20, 1
    %p206 = por %p204, %p205
    %p207 = scmp.ne.s32.totalorder %s198, %s199
    %p208 = scmp.eq.s32.totalorder %s20, 0
    %p209 = por %p207, %p208
    %p210 = scmp.ne.s32.totalorder %s198, %s199
    %p211 = scmp.eq.s32.totalorder %s21, 1
    %p212 = por %p210, %p211
    %p214 = scmp.ne.s32.totalorder %s199, %s213
    %p215 = scmp.eq.s32.totalorder %s21, 0
    %p216 = por %p214, %p215
    %s217 = ssub.s32 %s15, %s22
    %p218 = scmp.eq.s32.totalorder %s217, 0
    %s220 = sadd.s32 %s219, 1
    %s221 = scalar_select %p218, %s219, %s220
    %p224 = pneg %p218
    %p225 = scmp.eq.s32.totalorder %s15, 1
    %p226 = por %p224, %p225
    %p227 = scmp.ne.s32.totalorder %s219, %s222
    %p228 = scmp.eq.s32.totalorder %s15, 0
    %p229 = por %p227, %p228
    %p230 = scmp.ne.s32.totalorder %s219, %s222
    %p231 = scmp.eq.s32.totalorder %s20, 1
    %p232 = por %p230, %p231
    %p233 = scmp.ne.s32.totalorder %s222, %s223
    %p234 = scmp.eq.s32.totalorder %s20, 0
    %p235 = por %p233, %p234
    %p236 = scmp.ne.s32.totalorder %s222, %s223
    %p237 = scmp.eq.s32.totalorder %s21, 1
    %p238 = por %p236, %p237
    %p240 = scmp.ne.s32.totalorder %s223, %s239
    %p241 = scmp.eq.s32.totalorder %s21, 0
    %p242 = por %p240, %p241
    %p243 = scmp.le.s32.totalorder 1, %s15
    %p244 = scmp.lt.s32.totalorder %s15, 3
    %p245 = pnand %p243, %p244
    %p246 = pneg %p245
    // Predicated region
    $region9: #{bottleneck_pallas.1} parent=5 // pred_check
      _
    $region10: #{bottleneck_pallas.1} parent=5 // pred_check_branch
      %248 = sbr.rel (%p245) target = $region12
    $region11: #{bottleneck_pallas.1} parent=5 // pred_region
      %s249 = ssub.s32 %s15, 1
      // Predicated region
      $region13: #{bottleneck_pallas.1} parent=11 // pred_check
        %p250 = pneg %p62
      $region14: #{bottleneck_pallas.1} parent=11 // pred_check_branch
        %252 = sbr.rel (%p250) target = $region16
      $region15: #{bottleneck_pallas.1} parent=11 // pred_region
        _
      $region16: #{bottleneck_pallas.1} parent=11 // pred_fallthru
        _
      // Predicated region
      $region17: #{bottleneck_pallas.1} parent=11 // pred_check
        %p253 = pneg %p83
      $region18: #{bottleneck_pallas.1} parent=11 // pred_check_branch
        %255 = sbr.rel (%p253) target = $region20
      $region19: #{bottleneck_pallas.1} parent=11 // pred_region
        _
      $region20: #{bottleneck_pallas.1} parent=11 // pred_fallthru
        _
      // Predicated region
      $region21: #{bottleneck_pallas.1} parent=11 // pred_check
        %p256 = pneg %p104
      $region22: #{bottleneck_pallas.1} parent=11 // pred_check_branch
        %258 = sbr.rel (%p256) target = $region24
      $region23: #{bottleneck_pallas.1} parent=11 // pred_region
        _
      $region24: #{bottleneck_pallas.1} parent=11 // pred_fallthru
        _
      // Predicated region
      $region25: #{bottleneck_pallas.1} parent=11 // pred_check
        %p259 = pneg %p125
      $region26: #{bottleneck_pallas.1} parent=11 // pred_check_branch
        %261 = sbr.rel (%p259) target = $region28
      $region27: #{bottleneck_pallas.1} parent=11 // pred_region
        _
      $region28: #{bottleneck_pallas.1} parent=11 // pred_fallthru
        _
      // Predicated region
      $region29: #{bottleneck_pallas.1} parent=11 // pred_check
        %p262 = pneg %p146
      $region30: #{bottleneck_pallas.1} parent=11 // pred_check_branch
        %264 = sbr.rel (%p262) target = $region32
      $region31: #{bottleneck_pallas.1} parent=11 // pred_region
        _
      $region32: #{bottleneck_pallas.1} parent=11 // pred_fallthru
        _
      // Predicated region
      $region33: #{bottleneck_pallas.1} parent=11 // pred_check
        %p265 = pneg %p167
      $region34: #{bottleneck_pallas.1} parent=11 // pred_check_branch
        %267 = sbr.rel (%p265) target = $region36
      $region35: #{bottleneck_pallas.1} parent=11 // pred_region
        _
      $region36: #{bottleneck_pallas.1} parent=11 // pred_fallthru
        _
      // Predicated region
      $region37: #{bottleneck_pallas.1} parent=11 // pred_check
        %p268 = pneg %p188
      $region38: #{bottleneck_pallas.1} parent=11 // pred_check_branch
        %270 = sbr.rel (%p268) target = $region40
      $region39: #{bottleneck_pallas.1} parent=11 // pred_region
        _
      $region40: #{bottleneck_pallas.1} parent=11 // pred_fallthru
        _
      // Predicated region
      $region41: #{bottleneck_pallas.1} parent=11 // pred_check
        %p271 = pneg %p209
      $region42: #{bottleneck_pallas.1} parent=11 // pred_check_branch
        %273 = sbr.rel (%p271) target = $region44
      $region43: #{bottleneck_pallas.1} parent=11 // pred_region
        _
      $region44: #{bottleneck_pallas.1} parent=11 // pred_fallthru
        _
    $region12: #{bottleneck_pallas.1} parent=5 // pred_fallthru
      _
    %p274 = scmp.lt.s32.totalorder %s15, 2
    // Predicated region
    $region45: #{bottleneck_pallas.1} parent=5 // pred_check
      %p275 = pneg %p274
    $region46: #{bottleneck_pallas.1} parent=5 // pred_check_branch
      %277 = sbr.rel (%p275) target = $region48
    $region47: #{bottleneck_pallas.1} parent=5 // pred_region
      // Predicated region
      $region49: #{bottleneck_pallas.1} parent=47 // pred_check
        %p278 = pneg %p35
      $region50: #{bottleneck_pallas.1} parent=47 // pred_check_branch
        %280 = sbr.rel (%p278) target = $region52
      $region51: #{bottleneck_pallas.1} parent=47 // pred_region
        %p281 = scmp.lt.s32.totalorder %s15, 1
        %s282 = scalar_select %p281, %s15, 1
        %s283 = smul.addr %s282, 2
        %s284 = smul.addr %s283, 8
        %s285 = scalar_lea.vmem %s0, %s284
      $region52: #{bottleneck_pallas.1} parent=47 // pred_fallthru
        _
    $region48: #{bottleneck_pallas.1} parent=5 // pred_fallthru
      _
    %p286 = scmp.le.s32.totalorder 1, %s15
    %p287 = scmp.lt.s32.totalorder %s15, 3
    %p288 = pnand %p286, %p287
    %p289 = pneg %p288
    // Predicated region
    $region53: #{bottleneck_pallas.1} parent=5 // pred_check
      _
    $region54: #{bottleneck_pallas.1} parent=5 // pred_check_branch
      %291 = sbr.rel (%p288) target = $region56
    $region55: #{bottleneck_pallas.1} parent=5 // pred_region
      %s292 = ssub.s32 %s15, 1
      %p293 = scmp.lt.s32.totalorder %s20, 1
      %s294 = scalar_select %p293, %s20, 1
      %s295 = smul.addr %s294, 2
      %s296 = smul.addr %s295, 8
      %s297 = scalar_lea.vmem %s0, %s296
      %p298 = pneg %p41
      %p299 = pneg %p38
      %p300 = pneg %p62
      %p301 = pneg %p59
      %p302 = pneg %p83
      %p303 = pneg %p80
      %p304 = pneg %p104
      %p305 = pneg %p101
      %p306 = pneg %p125
      %p307 = pneg %p122
      %p308 = pneg %p146
      %p309 = pneg %p143
      %p310 = pneg %p167
      %p311 = pneg %p164
      %p312 = pneg %p188
      %p313 = pneg %p185
      %p314 = pneg %p209
      %p315 = pneg %p206
      %p316 = pneg %p235
      %p317 = pneg %p232
      %p318 = scmp.lt.s32.totalorder %s20, 1
      %s319 = scalar_select %p318, %s20, 1
      %s320 = smul.addr %s319, 2
      %s321 = smul.addr %s320, 8
      %s322 = scalar_lea.vmem %s9, %s321
      %p323 = scmp.lt.s32.totalorder %s20, 1
      %s324 = scalar_select %p323, %s20, 1
      %s325 = smul.addr %s324, 2
      %s326 = smul.addr %s325, 8
      %s327 = scalar_lea.vmem %s0, %s326
      %p328 = scmp.lt.s32.totalorder %s20, 1
      %s329 = scalar_select %p328, %s20, 1
      %s330 = smul.addr %s329, 2
      %s331 = smul.addr %s330, 8
      %s332 = scalar_lea.vmem %s9, %s331
      %v334 = vld [vmem:[%s327] sm:$0xff]
      %v335 = vld [vmem:[%s327 + $0x8] sm:$0xff]
      %v336 = vld [vmem:[%s7] sm:$0x3]
      %v337 = vld [vmem:[%s8] sm:$0x3]
      %v338 = vld [vmem:[%s1] sm:$0xf]
      %v339 = vpack.c.bf16 %v334, %v334
      %v340 = vpack.c.bf16 %v335, %v335
      %v341 = vld [vmem:[%s4] sm:$0xff]
      %343 = vset.pattern.permute.xlu0 0
      %344 = vperm.xlu0 %343, %v341
      %v345 = vpop.permute.xlu0 %344
      %vm347 = vcmask 64512
      %v349 = vsel %vm347, %v338, 0
      %vm351 = vcmask 1043456
      %v353 = vsel %vm351, %v339, 0
      %v356 = vsel %vm351, %v340, 0
      %358 = vmatprep.subr.bf16.mxu0 %v356
      %359 = vmatpush1.bf16.msra.mxu0 %v353
      %360 = vmatprep.subr.bf16.mxu0 0
      %361 = vmatpush1.bf16.msra.mxu0 0
      %362 = vmatprep.subr.bf16.mxu0 0
      %363 = vmatpush1.bf16.msra.mxu0 0
      %364 = vmatprep.subr.bf16.mxu0 0
      %365 = vmatpush1.bf16.msra.mxu0 0
      %366 = vmatprep.subr.bf16.mxu0 0
      %367 = vmatpush1.bf16.msra.mxu0 0
      %368 = vmatprep.subr.bf16.mxu0 0
      %369 = vmatpush1.bf16.msra.mxu0 0
      %370 = vmatprep.subr.bf16.mxu0 0
      %371 = vmatpush1.bf16.msra.mxu0 0
      %372 = vmatprep.subr.bf16.mxu0 0
      %373 = vmatpush1.bf16.msra.mxu0 0
      %374 = vmatprep.subr.bf16.mxu0 0
      %375 = vmatpush1.bf16.msra.mxu0 0
      %376 = vmatprep.subr.bf16.mxu0 0
      %377 = vmatpush1.bf16.msra.mxu0 0
      %378 = vmatprep.subr.bf16.mxu0 0
      %379 = vmatpush1.bf16.msra.mxu0 0
      %380 = vmatprep.subr.bf16.mxu0 0
      %381 = vmatpush1.bf16.msra.mxu0 0
      %382 = vmatprep.subr.bf16.mxu0 0
      %383 = vmatpush1.bf16.msra.mxu0 0
      %384 = vmatprep.subr.bf16.mxu0 0
      %385 = vmatpush1.bf16.msra.mxu0 0
      %386 = vmatprep.subr.bf16.mxu0 0
      %387 = vmatpush1.bf16.msra.mxu0 0
      %388 = vmatprep.subr.bf16.mxu0 0
      %389 = vmatpush1.bf16.msra.mxu0 0
      %390 = vmatprep.mubr.bf16.mxu0 0
      %391 = vmatmul.mubr.bf16.gmra.mrb[0].mxu0 %v349
      %v392 = vpop.f32.mrb[0].mxu0
      %v393 = vadd.f32 %v345, %v392
      %v394 = vpop.f32.mrb[0].mxu0
      %v395 = vadd.f32 %v345, %v394
      %v396 = vpop.f32.mrb[0].mxu0
      %v397 = vpop.f32.mrb[0].mxu0
      %398 = vdwg.mxu0
      %v399 = vmax.f32 %v393, 0.0
      %v400 = vmax.f32 %v395, 0.0
      %401 = vrot.lane.b32.xlu0 %v399, 17
      %v402 = vpop.permute.xlu0 %401
      %403 = vrot.lane.b32.xlu0 %v400, 17
      %v404 = vpop.permute.xlu0 %403
      %v405 = vlaneseq
      %v406 = vand.u32 %v405, 127
      %vm407 = vcmp.lt.s32.totalorder %v406, 17
      %v408 = vsel %vm407, %v402, %v404
      %v409 = vsel %vm407, %v404, %v402
      %vm410 = vcmp.ge.s32.totalorder %v336, 1
      %vm411 = vcmp.ge.s32.totalorder %v337, 1
      %vm412 = vmand %vm410, %vm411
      %v413 = vsel %vm412, 1, 0
      %v414 = vlaneseq
      %v415 = vshrl.u32 %v414, 7
      %v416 = vsub.s32 0, %v415
      %v417 = vrot.slane %v413, %v416
      %v418 = vlaneseq
      %v419 = vshrl.u32 %v418, 7
      %v420 = vsub.s32 1, %v419
      %v421 = vrot.slane %v413, %v420
      %vm422 = vcmp.eq.s32.totalorder %v417, 1
      %vm423 = vcmp.eq.s32.totalorder %v421, 1
      %v424 = vsel %vm422, %v409, 0.0
      %v425 = vsel %vm423, %v408, 0.0
      %426 = vrot.lane.b32.xlu0 %v399, 16
      %v427 = vpop.permute.xlu0 %426
      %428 = vrot.lane.b32.xlu0 %v400, 16
      %v429 = vpop.permute.xlu0 %428
      %vm430 = vcmp.lt.s32.totalorder %v406, 16
      %v431 = vsel %vm430, %v427, %v429
      %v432 = vsel %vm430, %v429, %v427
      %v433 = vsel %vm411, 1, 0
      %v434 = vlaneseq
      %v435 = vshrl.u32 %v434, 7
      %v436 = vsub.s32 0, %v435
      %v437 = vrot.slane %v433, %v436
      %v438 = vlaneseq
      %v439 = vshrl.u32 %v438, 7
      %v440 = vsub.s32 1, %v439
      %v441 = vrot.slane %v433, %v440
      %vm442 = vcmp.eq.s32.totalorder %v437, 1
      %vm443 = vcmp.eq.s32.totalorder %v441, 1
      %v444 = vsel %vm442, %v432, 0.0
      %v445 = vsel %vm443, %v431, 0.0
      %446 = vrot.lane.b32.xlu0 %v399, 15
      %v447 = vpop.permute.xlu0 %446
      %448 = vrot.lane.b32.xlu0 %v400, 15
      %v449 = vpop.permute.xlu0 %448
      %vm450 = vcmp.lt.s32.totalorder %v406, 15
      %v451 = vsel %vm450, %v447, %v449
      %v452 = vsel %vm450, %v449, %v447
      %vm453 = vcmp.le.s32.totalorder %v336, 14
      %vm454 = vmand %vm453, %vm411
      %v455 = vsel %vm454, 1, 0
      %v456 = vlaneseq
      %v457 = vshrl.u32 %v456, 7
      %v458 = vsub.s32 0, %v457
      %v459 = vrot.slane %v455, %v458
      %v460 = vlaneseq
      %v461 = vshrl.u32 %v460, 7
      %v462 = vsub.s32 1, %v461
      %v463 = vrot.slane %v455, %v462
      %vm464 = vcmp.eq.s32.totalorder %v459, 1
      %vm465 = vcmp.eq.s32.totalorder %v463, 1
      %v466 = vsel %vm464, %v452, 0.0
      %v467 = vsel %vm465, %v451, 0.0
      %468 = vrot.lane.b32.xlu0 %v399, 1
      %v469 = vpop.permute.xlu0 %468
      %470 = vrot.lane.b32.xlu0 %v400, 1
      %v471 = vpop.permute.xlu0 %470
      %vm472 = vcmp.lt.s32.totalorder %v406, 1
      %v473 = vsel %vm472, %v469, %v471
      %v474 = vsel %vm472, %v471, %v469
      %v475 = vsel %vm410, 1, 0
      %v476 = vlaneseq
      %v477 = vshrl.u32 %v476, 7
      %v478 = vsub.s32 0, %v477
      %v479 = vrot.slane %v475, %v478
      %v480 = vlaneseq
      %v481 = vshrl.u32 %v480, 7
      %v482 = vsub.s32 1, %v481
      %v483 = vrot.slane %v475, %v482
      %vm484 = vcmp.eq.s32.totalorder %v479, 1
      %vm485 = vcmp.eq.s32.totalorder %v483, 1
      %v486 = vsel %vm484, %v474, 0.0
      %v487 = vsel %vm485, %v473, 0.0
      %488 = vrot.lane.b32.xlu0 %v399, 127
      %v489 = vpop.permute.xlu0 %488
      %490 = vrot.lane.b32.xlu0 %v400, 127
      %v491 = vpop.permute.xlu0 %490
      %vm492 = vcmp.lt.s32.totalorder %v406, 127
      %v493 = vsel %vm492, %v489, %v491
      %v494 = vsel %vm492, %v491, %v489
      %v495 = vsel %vm453, 1, 0
      %v496 = vlaneseq
      %v497 = vshrl.u32 %v496, 7
      %v498 = vsub.s32 0, %v497
      %v499 = vrot.slane %v495, %v498
      %v500 = vlaneseq
      %v501 = vshrl.u32 %v500, 7
      %v502 = vsub.s32 1, %v501
      %v503 = vrot.slane %v495, %v502
      %vm504 = vcmp.eq.s32.totalorder %v499, 1
      %vm505 = vcmp.eq.s32.totalorder %v503, 1
      %v506 = vsel %vm504, %v493, 0.0
      %v507 = vsel %vm505, %v494, 0.0
      %508 = vrot.lane.b32.xlu0 %v399, 113
      %v509 = vpop.permute.xlu0 %508
      %510 = vrot.lane.b32.xlu0 %v400, 113
      %v511 = vpop.permute.xlu0 %510
      %vm512 = vcmp.lt.s32.totalorder %v406, 113
      %v513 = vsel %vm512, %v509, %v511
      %v514 = vsel %vm512, %v511, %v509
      %vm515 = vcmp.le.s32.totalorder %v337, 14
      %vm516 = vmand %vm410, %vm515
      %v517 = vsel %vm516, 1, 0
      %v518 = vlaneseq
      %v519 = vshrl.u32 %v518, 7
      %v520 = vsub.s32 0, %v519
      %v521 = vrot.slane %v517, %v520
      %v522 = vlaneseq
      %v523 = vshrl.u32 %v522, 7
      %v524 = vsub.s32 1, %v523
      %v525 = vrot.slane %v517, %v524
      %vm526 = vcmp.eq.s32.totalorder %v521, 1
      %vm527 = vcmp.eq.s32.totalorder %v525, 1
      %v528 = vsel %vm526, %v513, 0.0
      %v529 = vsel %vm527, %v514, 0.0
      %530 = vrot.lane.b32.xlu0 %v399, 112
      %v531 = vpop.permute.xlu0 %530
      %532 = vrot.lane.b32.xlu0 %v400, 112
      %v533 = vpop.permute.xlu0 %532
      %vm534 = vcmp.lt.s32.totalorder %v406, 112
      %v535 = vsel %vm534, %v531, %v533
      %v536 = vsel %vm534, %v533, %v531
      %v537 = vsel %vm515, 1, 0
      %v538 = vlaneseq
      %v539 = vshrl.u32 %v538, 7
      %v540 = vsub.s32 0, %v539
      %v541 = vrot.slane %v537, %v540
      %v542 = vlaneseq
      %v543 = vshrl.u32 %v542, 7
      %v544 = vsub.s32 1, %v543
      %v545 = vrot.slane %v537, %v544
      %vm546 = vcmp.eq.s32.totalorder %v541, 1
      %vm547 = vcmp.eq.s32.totalorder %v545, 1
      %v548 = vsel %vm546, %v535, 0.0
      %v549 = vsel %vm547, %v536, 0.0
      %550 = vrot.lane.b32.xlu0 %v399, 111
      %v551 = vpop.permute.xlu0 %550
      %552 = vrot.lane.b32.xlu0 %v400, 111
      %v553 = vpop.permute.xlu0 %552
      %vm554 = vcmp.lt.s32.totalorder %v406, 111
      %v555 = vsel %vm554, %v551, %v553
      %v556 = vsel %vm554, %v553, %v551
      %vm557 = vmand %vm453, %vm515
      %v558 = vsel %vm557, 1, 0
      %v559 = vlaneseq
      %v560 = vshrl.u32 %v559, 7
      %v561 = vsub.s32 0, %v560
      %v562 = vrot.slane %v558, %v561
      %v563 = vlaneseq
      %v564 = vshrl.u32 %v563, 7
      %v565 = vsub.s32 1, %v564
      %v566 = vrot.slane %v558, %v565
      %vm567 = vcmp.eq.s32.totalorder %v562, 1
      %vm568 = vcmp.eq.s32.totalorder %v566, 1
      %v569 = vsel %vm567, %v555, 0.0
      %v570 = vsel %vm568, %v556, 0.0
      %v571 = vpack.c.bf16 %v444, %v424
      %v572 = vpack.c.bf16 %v445, %v425
      %v573 = vpack.c.bf16 %v486, %v466
      %v574 = vpack.c.bf16 %v487, %v467
      %v575 = vpack.c.bf16 %v506, %v399
      %v576 = vpack.c.bf16 %v507, %v400
      %v577 = vpack.c.bf16 %v548, %v528
      %v578 = vpack.c.bf16 %v549, %v529
      %v579 = vpack.c.bf16 %v569, %v569
      %v580 = vpack.c.bf16 %v570, %v570
      %v581 = vld [vmem:[%s2] sm:$0xf]
      %v582 = vld [vmem:[%s5] sm:$0xff]
      %584 = vset.pattern.permute.xlu0 0
      %585 = vperm.xlu0 %584, %v582
      %v586 = vpop.permute.xlu0 %585
      %vm588 = vcmask 588800
      %v590 = vsel %vm588, %v581, 0
      %v593 = vsel %vm351, %v579, 0
      %v596 = vsel %vm351, %v580, 0
      %598 = vmatprep.subr.bf16.mxu0 %v572
      %599 = vmatpush1.bf16.msra.mxu0 %v571
      %600 = vmatprep.subr.bf16.mxu0 %v574
      %601 = vmatpush1.bf16.msra.mxu0 %v573
      %602 = vmatprep.subr.bf16.mxu0 %v576
      %603 = vmatpush1.bf16.msra.mxu0 %v575
      %604 = vmatprep.subr.bf16.mxu0 %v578
      %605 = vmatpush1.bf16.msra.mxu0 %v577
      %606 = vmatprep.subr.bf16.mxu0 %v596
      %607 = vmatpush1.bf16.msra.mxu0 %v593
      %608 = vmatprep.subr.bf16.mxu0 0
      %609 = vmatpush1.bf16.msra.mxu0 0
      %610 = vmatprep.subr.bf16.mxu0 0
      %611 = vmatpush1.bf16.msra.mxu0 0
      %612 = vmatprep.subr.bf16.mxu0 0
      %613 = vmatpush1.bf16.msra.mxu0 0
      %614 = vmatprep.subr.bf16.mxu0 0
      %615 = vmatpush1.bf16.msra.mxu0 0
      %616 = vmatprep.subr.bf16.mxu0 0
      %617 = vmatpush1.bf16.msra.mxu0 0
      %618 = vmatprep.subr.bf16.mxu0 0
      %619 = vmatpush1.bf16.msra.mxu0 0
      %620 = vmatprep.subr.bf16.mxu0 0
      %621 = vmatpush1.bf16.msra.mxu0 0
      %622 = vmatprep.subr.bf16.mxu0 0
      %623 = vmatpush1.bf16.msra.mxu0 0
      %624 = vmatprep.subr.bf16.mxu0 0
      %625 = vmatpush1.bf16.msra.mxu0 0
      %626 = vmatprep.subr.bf16.mxu0 0
      %627 = vmatpush1.bf16.msra.mxu0 0
      %628 = vmatprep.subr.bf16.mxu0 0
      %629 = vmatpush1.bf16.msra.mxu0 0
      %630 = vmatprep.mubr.bf16.mxu0 0
      %631 = vmatmul.mubr.bf16.gmra.mrb[0].mxu0 %v590
      %v632 = vpop.f32.mrb[0].mxu0
      %v633 = vadd.f32 %v586, %v632
      %v634 = vpop.f32.mrb[0].mxu0
      %v635 = vadd.f32 %v586, %v634
      %v636 = vpop.f32.mrb[0].mxu0
      %v637 = vpop.f32.mrb[0].mxu0
      %638 = vdwg.mxu0
      %v639 = vmax.f32 %v633, 0.0
      %v640 = vmax.f32 %v635, 0.0
      %v641 = vld [vmem:[%s3] sm:$0xf]
      %v642 = vpack.c.bf16 %v639, %v639
      %v643 = vpack.c.bf16 %v640, %v640
      %v644 = vld [vmem:[%s6] sm:$0xff]
      %646 = vset.pattern.permute.xlu0 0
      %647 = vperm.xlu0 %646, %v644
      %v648 = vpop.permute.xlu0 %647
      %v651 = vsel %vm347, %v641, 0
      %v654 = vsel %vm351, %v642, 0
      %v657 = vsel %vm351, %v643, 0
      %659 = vmatprep.subr.bf16.mxu0 %v657
      %660 = vmatpush1.bf16.msra.mxu0 %v654
      %661 = vmatprep.subr.bf16.mxu0 0
      %662 = vmatpush1.bf16.msra.mxu0 0
      %663 = vmatprep.subr.bf16.mxu0 0
      %664 = vmatpush1.bf16.msra.mxu0 0
      %665 = vmatprep.subr.bf16.mxu0 0
      %666 = vmatpush1.bf16.msra.mxu0 0
      %667 = vmatprep.subr.bf16.mxu0 0
      %668 = vmatpush1.bf16.msra.mxu0 0
      %669 = vmatprep.subr.bf16.mxu0 0
      %670 = vmatpush1.bf16.msra.mxu0 0
      %671 = vmatprep.subr.bf16.mxu0 0
      %672 = vmatpush1.bf16.msra.mxu0 0
      %673 = vmatprep.subr.bf16.mxu0 0
      %674 = vmatpush1.bf16.msra.mxu0 0
      %675 = vmatprep.subr.bf16.mxu0 0
      %676 = vmatpush1.bf16.msra.mxu0 0
      %677 = vmatprep.subr.bf16.mxu0 0
      %678 = vmatpush1.bf16.msra.mxu0 0
      %679 = vmatprep.subr.bf16.mxu0 0
      %680 = vmatpush1.bf16.msra.mxu0 0
      %681 = vmatprep.subr.bf16.mxu0 0
      %682 = vmatpush1.bf16.msra.mxu0 0
      %683 = vmatprep.subr.bf16.mxu0 0
      %684 = vmatpush1.bf16.msra.mxu0 0
      %685 = vmatprep.subr.bf16.mxu0 0
      %686 = vmatpush1.bf16.msra.mxu0 0
      %687 = vmatprep.subr.bf16.mxu0 0
      %688 = vmatpush1.bf16.msra.mxu0 0
      %689 = vmatprep.subr.bf16.mxu0 0
      %690 = vmatpush1.bf16.msra.mxu0 0
      %691 = vmatprep.mubr.bf16.mxu0 0
      %692 = vmatmul.mubr.bf16.gmra.mrb[0].mxu0 %v651
      %v693 = vpop.f32.mrb[0].mxu0
      %v694 = vadd.f32 %v648, %v693
      %v695 = vpop.f32.mrb[0].mxu0
      %v696 = vadd.f32 %v648, %v695
      %v697 = vpop.f32.mrb[0].mxu0
      %v698 = vpop.f32.mrb[0].mxu0
      %699 = vdwg.mxu0
      %v700 = vadd.f32 %v694, %v334
      %v701 = vadd.f32 %v696, %v335
      %v702 = vmax.f32 %v700, 0.0
      %v703 = vmax.f32 %v701, 0.0
      %704 = vst [vmem:[%s332] sm:$0xff] %v702
      %705 = vst [vmem:[%s332 + $0x8] sm:$0xff] %v703
      %p706 = scmp.lt.s32.totalorder %s20, 1
      %s707 = scalar_select %p706, %s20, 1
      %s708 = smul.addr %s707, 2
      %s709 = smul.addr %s708, 8
      %s710 = scalar_lea.vmem %s9, %s709
      // Predicated region
      $region57: #{bottleneck_pallas.1} parent=55 // pred_check
        %p711 = pneg %p232
      $region58: #{bottleneck_pallas.1} parent=55 // pred_check_branch
        %713 = sbr.rel (%p711) target = $region60
      $region59: #{bottleneck_pallas.1} parent=55 // pred_region
        _
      $region60: #{bottleneck_pallas.1} parent=55 // pred_fallthru
        _
    $region56: #{bottleneck_pallas.1} parent=5 // pred_fallthru
      _
    %p714 = scmp.le.s32.totalorder 2, %s15
    // Predicated region
    $region61: #{bottleneck_pallas.1} parent=5 // pred_check
      %p715 = pneg %p714
    $region62: #{bottleneck_pallas.1} parent=5 // pred_check_branch
      %717 = sbr.rel (%p715) target = $region64
    $region63: #{bottleneck_pallas.1} parent=5 // pred_region
      %s718 = ssub.s32 %s15, 2
      // Predicated region
      $region65: #{bottleneck_pallas.1} parent=63 // pred_check
        %p719 = pneg %p238
      $region66: #{bottleneck_pallas.1} parent=63 // pred_check_branch
        %721 = sbr.rel (%p719) target = $region68
      $region67: #{bottleneck_pallas.1} parent=63 // pred_region
        %p722 = scmp.lt.s32.totalorder %s21, 1
        %s723 = scalar_select %p722, %s21, 1
        %s724 = smul.addr %s723, 2
        %s725 = smul.addr %s724, 8
        %s726 = scalar_lea.vmem %s9, %s725
      $region68: #{bottleneck_pallas.1} parent=63 // pred_fallthru
        _
    $region64: #{bottleneck_pallas.1} parent=5 // pred_fallthru
      _
  $region6: #{bottleneck_pallas.1} parent=0 // loop_footer
    %s19 = sadd.s32 1, %s15
  $region7: #{bottleneck_pallas.1} parent=0 // loop_footer_branch
    %14 = sbr.rel target = $region3
  $region8: #{bottleneck_pallas.1} parent=0 // loop_exit
    _

</llo_original>
